<compile_context>
chip_gen: v5e
topology: v5e:2x2
jax: 0.10.0
libtpu: 0.0.40
codegen_flags: <defaults>
</compile_context>

<pallas_src>
import functools
import math

import jax
import jax.numpy as jnp
from jax.experimental import pallas as pl
from jax.experimental.pallas import tpu as pltpu


def _round_up(n: int, m: int) -> int:
    return ((n + m - 1) // m) * m


def _mlp_kernel(*refs, num_layers: int):
    """Fused MLP: x -> [Linear + ReLU]*(L-1) -> Linear.

    refs = (x_ref, w0_ref, b0_ref, ..., w{L-1}_ref, b{L-1}_ref, o_ref)
    x_ref: (B_pad, K0_pad); w_l: (K_l_pad, N_l_pad); b_l: (1, N_l_pad);
    o_ref: (B_pad, N_{L-1}_pad).  All f32, all resident in VMEM.
    """
    x_ref = refs[0]
    o_ref = refs[-1]
    wb = refs[1:-1]

    h = x_ref[...]
    for l in range(num_layers):
        w_ref = wb[2 * l]
        b_ref = wb[2 * l + 1]
        h = jnp.dot(h, w_ref[...], preferred_element_type=jnp.float32)
        h = h + b_ref[...]
        if l < num_layers - 1:
            h = jnp.maximum(h, 0.0)
    o_ref[...] = h.astype(o_ref.dtype)


def init_simplenet_params(
    key,
    nb_in_channels=1,
    input_shape=(28, 28),
    nodes_per_layer=(84, 50),
    nb_out_channels=10,
):
    """Deterministic PyTorch-style init. Returns [(W(N,K), b(N,)), ...]."""
    in_flat = input_shape[0] * input_shape[1] * nb_in_channels
    dims = [in_flat] + list(nodes_per_layer) + [nb_out_channels]
    params = []
    for fan_in, fan_out in zip(dims[:-1], dims[1:]):
        key, kw, kb = jax.random.split(key, 3)
        bound = 1.0 / math.sqrt(fan_in)
        w = jax.random.uniform(kw, (fan_out, fan_in), jnp.float32, -bound, bound)
        b = jax.random.uniform(kb, (fan_out,), jnp.float32, -bound, bound)
        params.append((w, b))
    return params, in_flat


def prepare_params(params):
    """One-time: transpose W to (K, N) and zero-pad K, N to multiples of 128.

    Returns a flat list [w0p, b0p, w1p, b1p, ...] ready for the fused kernel.
    Zero padding is exact: padded K-rows of W multiply zero-padded x columns,
    padded N-columns carry zero weights + zero bias (ReLU(0) = 0), so every
    real output element is unchanged.
    """
    padded = []
    for w, b in params:
        n, k = w.shape
        k_pad = _round_up(k, 128)
        n_pad = _round_up(n, 128)
        w_t = jnp.transpose(w)  # (K, N)
        w_p = jnp.zeros((k_pad, n_pad), jnp.float32).at[:k, :n].set(w_t)
        b_p = jnp.zeros((1, n_pad), jnp.float32).at[0, :n].set(b)
        padded.append(w_p)
        padded.append(b_p)
    return padded


@functools.partial(jax.jit, static_argnames=("in_flat", "nb_out"))
def simplenet_forward(x, padded_params, in_flat, nb_out):
    """x: (B, C, H, W) any float dtype -> logits (B, nb_out) f32."""
    x2 = x.reshape(-1, in_flat).astype(jnp.float32)  # NCHW flatten (glue)
    b_real = x2.shape[0]

    k0_pad = padded_params[0].shape[0]
    n_out_pad = padded_params[-1].shape[1]
    b_pad = max(_round_up(b_real, 8), 8)  # fill f32 sublanes

    x_p = jnp.zeros((b_pad, k0_pad), jnp.float32).at[:b_real, :in_flat].set(x2)

    num_layers = len(padded_params) // 2
    kernel = functools.partial(_mlp_kernel, num_layers=num_layers)

    out_p = pl.pallas_call(
        kernel,
        out_shape=jax.ShapeDtypeStruct((b_pad, n_out_pad), jnp.float32),
        in_specs=[pl.BlockSpec(memory_space=pltpu.MemorySpace.VMEM)]
        * (1 + 2 * num_layers),
        out_specs=pl.BlockSpec(memory_space=pltpu.MemorySpace.VMEM),
    )(x_p, *padded_params)

    return out_p[:b_real, :nb_out]


if __name__ == "__main__":
    key = jax.random.PRNGKey(0)
    k_params, k_x = jax.random.split(key)

    nb_in_channels = 1
    input_shape = (28, 28)
    nodes_per_layer = (84, 50)
    nb_out_channels = 10
    batch = 2

    params, in_flat = init_simplenet_params(
        k_params,
        nb_in_channels=nb_in_channels,
        input_shape=input_shape,
        nodes_per_layer=nodes_per_layer,
        nb_out_channels=nb_out_channels,
    )
    padded_params = prepare_params(params)  # one-time prep, outside forward

    x = jax.random.normal(
        k_x, (batch, nb_in_channels, input_shape[0], input_shape[1]), jnp.float32
    )

    out = simplenet_forward(x, padded_params, in_flat=in_flat, nb_out=nb_out_channels)
    out = jax.block_until_ready(out)
    assert out.shape == (batch, nb_out_channels), out.shape
    assert out.dtype == jnp.float32, out.dtype

    # Pure-JAX reference check of the same math (unpadded params).
    ref = x.reshape(-1, in_flat).astype(jnp.float32)
    for w, b in params[:-1]:
        ref = jnp.maximum(ref @ w.T + b, 0.0)
    w, b = params[-1]
    ref = ref @ w.T + b
    assert jnp.allclose(out, ref, atol=1e-4, rtol=1e-4)

    print("KERNEL_OK")
</pallas_src>

<mosaic_0001>
module attributes {stable_mosaic.version = 11 : i64} {
  func.func @_mlp_kernel(%arg0: memref<8x896xf32, #tpu.memory_space<vmem>>, %arg1: memref<896x128xf32, #tpu.memory_space<vmem>>, %arg2: memref<1x128xf32, #tpu.memory_space<vmem>>, %arg3: memref<128x128xf32, #tpu.memory_space<vmem>>, %arg4: memref<1x128xf32, #tpu.memory_space<vmem>>, %arg5: memref<128x128xf32, #tpu.memory_space<vmem>>, %arg6: memref<1x128xf32, #tpu.memory_space<vmem>>, %arg7: memref<8x128xf32, #tpu.memory_space<vmem>>) attributes {dimension_semantics = [], scalar_prefetch = 0 : i64, scratch_operands = 0 : i64, tpu.core_type = #tpu.core_type<tc>} {
    %c0 = arith.constant 0 : index
    %c0_0 = arith.constant 0 : index
    %0 = vector.load %arg0[%c0, %c0_0] : memref<8x896xf32, #tpu.memory_space<vmem>>, vector<8x896xf32>
    %c0_1 = arith.constant 0 : index
    %c0_2 = arith.constant 0 : index
    %1 = vector.load %arg1[%c0_1, %c0_2] : memref<896x128xf32, #tpu.memory_space<vmem>>, vector<896x128xf32>
    %cst = arith.constant dense<0.000000e+00> : vector<8x128xf32>
    %2 = tpu.matmul %0, %1, %cst {dimension_numbers = #tpu.dot_dimension_numbers<[1], [0], [0], [1], [0, 0, 1, 1], [], []>} : vector<8x896xf32>, vector<896x128xf32>, vector<8x128xf32> -> vector<8x128xf32>
    %c0_3 = arith.constant 0 : index
    %c0_4 = arith.constant 0 : index
    %3 = vector.load %arg2[%c0_3, %c0_4] : memref<1x128xf32, #tpu.memory_space<vmem>>, vector<1x128xf32>
    %4 = vector.broadcast %3 : vector<1x128xf32> to vector<8x128xf32>
    %5 = arith.addf %2, %4 : vector<8x128xf32>
    %cst_5 = arith.constant 0.000000e+00 : f32
    %6 = vector.broadcast %cst_5 : f32 to vector<8x128xf32>
    %7 = arith.maximumf %5, %6 : vector<8x128xf32>
    %c0_6 = arith.constant 0 : index
    %c0_7 = arith.constant 0 : index
    %8 = vector.load %arg3[%c0_6, %c0_7] : memref<128x128xf32, #tpu.memory_space<vmem>>, vector<128x128xf32>
    %cst_8 = arith.constant dense<0.000000e+00> : vector<8x128xf32>
    %9 = tpu.matmul %7, %8, %cst_8 {dimension_numbers = #tpu.dot_dimension_numbers<[1], [0], [0], [1], [0, 0, 1, 1], [], []>} : vector<8x128xf32>, vector<128x128xf32>, vector<8x128xf32> -> vector<8x128xf32>
    %c0_9 = arith.constant 0 : index
    %c0_10 = arith.constant 0 : index
    %10 = vector.load %arg4[%c0_9, %c0_10] : memref<1x128xf32, #tpu.memory_space<vmem>>, vector<1x128xf32>
    %11 = vector.broadcast %10 : vector<1x128xf32> to vector<8x128xf32>
    %12 = arith.addf %9, %11 : vector<8x128xf32>
    %cst_11 = arith.constant 0.000000e+00 : f32
    %13 = vector.broadcast %cst_11 : f32 to vector<8x128xf32>
    %14 = arith.maximumf %12, %13 : vector<8x128xf32>
    %c0_12 = arith.constant 0 : index
    %c0_13 = arith.constant 0 : index
    %15 = vector.load %arg5[%c0_12, %c0_13] : memref<128x128xf32, #tpu.memory_space<vmem>>, vector<128x128xf32>
    %cst_14 = arith.constant dense<0.000000e+00> : vector<8x128xf32>
    %16 = tpu.matmul %14, %15, %cst_14 {dimension_numbers = #tpu.dot_dimension_numbers<[1], [0], [0], [1], [0, 0, 1, 1], [], []>} : vector<8x128xf32>, vector<128x128xf32>, vector<8x128xf32> -> vector<8x128xf32>
    %c0_15 = arith.constant 0 : index
    %c0_16 = arith.constant 0 : index
    %17 = vector.load %arg6[%c0_15, %c0_16] : memref<1x128xf32, #tpu.memory_space<vmem>>, vector<1x128xf32>
    %18 = vector.broadcast %17 : vector<1x128xf32> to vector<8x128xf32>
    %19 = arith.addf %16, %18 : vector<8x128xf32>
    %c0_17 = arith.constant 0 : index
    %c0_18 = arith.constant 0 : index
    %20 = vector.load %arg7[%c0_17, %c0_18] : memref<8x128xf32, #tpu.memory_space<vmem>>, vector<8x128xf32>
    tpu.vector_store %arg7[%c0_17, %c0_18], %19 {strides = array<i32>} : memref<8x128xf32, #tpu.memory_space<vmem>>, vector<8x128xf32>,
    return
  }
}

</mosaic_0001>

<llo_original>
// kernel: simplenet_forward.1
$region0: #{simplenet_forward.1}
  #allocation0 [shape = 'u32[]', space=smem, size = 0x4, offset = 0x4, fixed_abs, tag = 'smem constant byte address 0x4 - core index']
  #allocation1 [shape = 'u32[72,128]{1,0:T(1,128)}', space=vmem, size = 0x9000, scoped, tag = 'internal scratch']
  %s0 = inlined_call_operand.vmem [shape: f32[8,896], index: 0, kind: input, shape index: {}]
  %s1 = inlined_call_operand.hbm [shape: f32[896,128], index: 1, kind: input, shape index: {}]
  %s2 = inlined_call_operand.vmem [shape: f32[1,128], index: 2, kind: input, shape index: {}]
  %s3 = inlined_call_operand.vmem [shape: f32[128,128], index: 3, kind: input, shape index: {}]
  %s4 = inlined_call_operand.vmem [shape: f32[1,128], index: 4, kind: input, shape index: {}]
  %s5 = inlined_call_operand.vmem [shape: f32[128,128], index: 5, kind: input, shape index: {}]
  %s6 = inlined_call_operand.vmem [shape: f32[1,128], index: 6, kind: input, shape index: {}]
  %s7 = inlined_call_operand.vmem [shape: f32[8,128], index: 7, kind: output, shape index: {}]
  %s8 = sld [smem:[#allocation0]]
  $region42: #{simplenet_forward.1} parent=0
    _
  %s10 = ssub.s32 1, %s8
  %s11 = scalar_select 0, %s10, %s8
  $region1: #{simplenet_forward.1} parent=0
    #allocation2 [shape = 'u8[458752]{0}', space=vmem, size = 0x70000, scoped, tag = 'input window, operand 1, single buffered']
    #allocation3 [shape = 's32[1]{0}', space=sflag, size = 0x4, scoped, tag = 'scoped memory for simplenet_forward.1']
    %12 = vsyncpa [#allocation3], 0
    // Predicated region
    $region2: #{simplenet_forward.1} parent=1 // pred_check
      _
    $region3: #{simplenet_forward.1} parent=1 // pred_check_branch
      %14 = sbr.rel (0) target = $region5
    $region4: #{simplenet_forward.1} parent=1 // pred_region
      _
    $region5: #{simplenet_forward.1} parent=1 // pred_fallthru
      _
    // Predicated region
    $region6: #{simplenet_forward.1} parent=1 // pred_check
      _
    $region7: #{simplenet_forward.1} parent=1 // pred_check_branch
      %16 = sbr.rel (0) target = $region9
    $region8: #{simplenet_forward.1} parent=1 // pred_region
      %18 = vsyncadd [#allocation3], 0
      %s19 = sshll.u32 %s1, 4
      %s20 = int_to_ptr.hbm [resolvable:$true] %s19
      %s21 = sshll.u32 [#allocation2], 4
      %s22 = int_to_ptr.vmem [resolvable:$true] %s21
      %27 = dma.hbm_to_vmem [thread:$0]  %s20, 14336, %s22, [#allocation3], 128, 128, 8
    $region9: #{simplenet_forward.1} parent=1 // pred_fallthru
      _
    // Predicated region
    $region10: #{simplenet_forward.1} parent=1 // pred_check
      _
    $region11: #{simplenet_forward.1} parent=1 // pred_check_branch
      %29 = sbr.rel (0) target = $region13
    $region12: #{simplenet_forward.1} parent=1 // pred_region
      _
    $region13: #{simplenet_forward.1} parent=1 // pred_fallthru
      _
    // Predicated region
    $region14: #{simplenet_forward.1} parent=1 // pred_check
      _
    $region15: #{simplenet_forward.1} parent=1 // pred_check_branch
      %31 = sbr.rel (0) target = $region17
    $region16: #{simplenet_forward.1} parent=1 // pred_region
      _
    $region17: #{simplenet_forward.1} parent=1 // pred_fallthru
      _
    // Predicated region
    $region18: #{simplenet_forward.1} parent=1 // pred_check
      _
    $region19: #{simplenet_forward.1} parent=1 // pred_check_branch
      %33 = sbr.rel (0) target = $region21
    $region20: #{simplenet_forward.1} parent=1 // pred_region
      _
    $region21: #{simplenet_forward.1} parent=1 // pred_fallthru
      _
    // Predicated region
    $region22: #{simplenet_forward.1} parent=1 // pred_check
      _
    $region23: #{simplenet_forward.1} parent=1 // pred_check_branch
      %35 = sbr.rel (0) target = $region25
    $region24: #{simplenet_forward.1} parent=1 // pred_region
      _
    $region25: #{simplenet_forward.1} parent=1 // pred_fallthru
      _
    // Predicated region
    $region26: #{simplenet_forward.1} parent=1 // pred_check
      _
    $region27: #{simplenet_forward.1} parent=1 // pred_check_branch
      %37 = sbr.rel (0) target = $region29
    $region28: #{simplenet_forward.1} parent=1 // pred_region
      _
    $region29: #{simplenet_forward.1} parent=1 // pred_fallthru
      _
    // Predicated region
    $region30: #{simplenet_forward.1} parent=1 // pred_check
      _
    $region31: #{simplenet_forward.1} parent=1 // pred_check_branch
      %39 = sbr.rel (0) target = $region33
    $region32: #{simplenet_forward.1} parent=1 // pred_region
      %41 = dma.done [#allocation3], 14336
    $region33: #{simplenet_forward.1} parent=1 // pred_fallthru
      _
    %v42 = vld [vmem:[%s0] sm:$0xff]
    %v43 = vld [vmem:[%s0 + $0x8] sm:$0xff]
    %v44 = vld [vmem:[%s0 + $0x10] sm:$0xff]
    %v45 = vld [vmem:[%s0 + $0x18] sm:$0xff]
    %v46 = vld [vmem:[%s0 + $0x20] sm:$0xff]
    %v47 = vld [vmem:[%s0 + $0x28] sm:$0xff]
    %v48 = vld [vmem:[%s0 + $0x30] sm:$0xff]
    %v49 = vld [vmem:[#allocation2] sm:$0xff]
    %v50 = vld [vmem:[#allocation2 + $0x8] sm:$0xff]
    %v51 = vld [vmem:[#allocation2 + $0x10] sm:$0xff]
    %v52 = vld [vmem:[#allocation2 + $0x18] sm:$0xff]
    %v53 = vld [vmem:[#allocation2 + $0x20] sm:$0xff]
    %v54 = vld [vmem:[#allocation2 + $0x28] sm:$0xff]
    %v55 = vld [vmem:[#allocation2 + $0x30] sm:$0xff]
    %v56 = vld [vmem:[#allocation2 + $0x38] sm:$0xff]
    %v57 = vld [vmem:[#allocation2 + $0x40] sm:$0xff]
    %v58 = vld [vmem:[#allocation2 + $0x48] sm:$0xff]
    %v59 = vld [vmem:[#allocation2 + $0x50] sm:$0xff]
    %v60 = vld [vmem:[#allocation2 + $0x58] sm:$0xff]
    %v61 = vld [vmem:[#allocation2 + $0x60] sm:$0xff]
    %v62 = vld [vmem:[#allocation2 + $0x68] sm:$0xff]
    %v63 = vld [vmem:[#allocation2 + $0x70] sm:$0xff]
    %v64 = vld [vmem:[#allocation2 + $0x78] sm:$0xff]
    %v65 = vld [vmem:[#allocation2 + $0x80] sm:$0xff]
    %v66 = vld [vmem:[#allocation2 + $0x88] sm:$0xff]
    %v67 = vld [vmem:[#allocation2 + $0x90] sm:$0xff]
    %v68 = vld [vmem:[#allocation2 + $0x98] sm:$0xff]
    %v69 = vld [vmem:[#allocation2 + $0xa0] sm:$0xff]
    %v70 = vld [vmem:[#allocation2 + $0xa8] sm:$0xff]
    %v71 = vld [vmem:[#allocation2 + $0xb0] sm:$0xff]
    %v72 = vld [vmem:[#allocation2 + $0xb8] sm:$0xff]
    %v73 = vld [vmem:[#allocation2 + $0xc0] sm:$0xff]
    %v74 = vld [vmem:[#allocation2 + $0xc8] sm:$0xff]
    %v75 = vld [vmem:[#allocation2 + $0xd0] sm:$0xff]
    %v76 = vld [vmem:[#allocation2 + $0xd8] sm:$0xff]
    %v77 = vld [vmem:[#allocation2 + $0xe0] sm:$0xff]
    %v78 = vld [vmem:[#allocation2 + $0xe8] sm:$0xff]
    %v79 = vld [vmem:[#allocation2 + $0xf0] sm:$0xff]
    %v80 = vld [vmem:[#allocation2 + $0xf8] sm:$0xff]
    %v81 = vld [vmem:[#allocation2 + $0x100] sm:$0xff]
    %v82 = vld [vmem:[#allocation2 + $0x108] sm:$0xff]
    %v83 = vld [vmem:[#allocation2 + $0x110] sm:$0xff]
    %v84 = vld [vmem:[#allocation2 + $0x118] sm:$0xff]
    %v85 = vld [vmem:[#allocation2 + $0x120] sm:$0xff]
    %v86 = vld [vmem:[#allocation2 + $0x128] sm:$0xff]
    %v87 = vld [vmem:[#allocation2 + $0x130] sm:$0xff]
    %v88 = vld [vmem:[#allocation2 + $0x138] sm:$0xff]
    %v89 = vld [vmem:[#allocation2 + $0x140] sm:$0xff]
    %v90 = vld [vmem:[#allocation2 + $0x148] sm:$0xff]
    %v91 = vld [vmem:[#allocation2 + $0x150] sm:$0xff]
    %v92 = vld [vmem:[#allocation2 + $0x158] sm:$0xff]
    %v93 = vld [vmem:[#allocation2 + $0x160] sm:$0xff]
    %v94 = vld [vmem:[#allocation2 + $0x168] sm:$0xff]
    %v95 = vld [vmem:[#allocation2 + $0x170] sm:$0xff]
    %v96 = vld [vmem:[#allocation2 + $0x178] sm:$0xff]
    %v97 = vld [vmem:[#allocation2 + $0x180] sm:$0xff]
    %v98 = vld [vmem:[#allocation2 + $0x188] sm:$0xff]
    %v99 = vld [vmem:[#allocation2 + $0x190] sm:$0xff]
    %v100 = vld [vmem:[#allocation2 + $0x198] sm:$0xff]
    %v101 = vld [vmem:[#allocation2 + $0x1a0] sm:$0xff]
    %v102 = vld [vmem:[#allocation2 + $0x1a8] sm:$0xff]
    %v103 = vld [vmem:[#allocation2 + $0x1b0] sm:$0xff]
    %v104 = vld [vmem:[#allocation2 + $0x1b8] sm:$0xff]
    %v105 = vld [vmem:[#allocation2 + $0x1c0] sm:$0xff]
    %v106 = vld [vmem:[#allocation2 + $0x1c8] sm:$0xff]
    %v107 = vld [vmem:[#allocation2 + $0x1d0] sm:$0xff]
    %v108 = vld [vmem:[#allocation2 + $0x1d8] sm:$0xff]
    %v109 = vld [vmem:[#allocation2 + $0x1e0] sm:$0xff]
    %v110 = vld [vmem:[#allocation2 + $0x1e8] sm:$0xff]
    %v111 = vld [vmem:[#allocation2 + $0x1f0] sm:$0xff]
    %v112 = vld [vmem:[#allocation2 + $0x1f8] sm:$0xff]
    %v113 = vld [vmem:[#allocation2 + $0x200] sm:$0xff]
    %v114 = vld [vmem:[#allocation2 + $0x208] sm:$0xff]
    %v115 = vld [vmem:[#allocation2 + $0x210] sm:$0xff]
    %v116 = vld [vmem:[#allocation2 + $0x218] sm:$0xff]
    %v117 = vld [vmem:[#allocation2 + $0x220] sm:$0xff]
    %v118 = vld [vmem:[#allocation2 + $0x228] sm:$0xff]
    %v119 = vld [vmem:[#allocation2 + $0x230] sm:$0xff]
    %v120 = vld [vmem:[#allocation2 + $0x238] sm:$0xff]
    %v121 = vld [vmem:[#allocation2 + $0x240] sm:$0xff]
    %v122 = vld [vmem:[#allocation2 + $0x248] sm:$0xff]
    %v123 = vld [vmem:[#allocation2 + $0x250] sm:$0xff]
    %v124 = vld [vmem:[#allocation2 + $0x258] sm:$0xff]
    %v125 = vld [vmem:[#allocation2 + $0x260] sm:$0xff]
    %v126 = vld [vmem:[#allocation2 + $0x268] sm:$0xff]
    %v127 = vld [vmem:[#allocation2 + $0x270] sm:$0xff]
    %v128 = vld [vmem:[#allocation2 + $0x278] sm:$0xff]
    %v129 = vld [vmem:[#allocation2 + $0x280] sm:$0xff]
    %v130 = vld [vmem:[#allocation2 + $0x288] sm:$0xff]
    %v131 = vld [vmem:[#allocation2 + $0x290] sm:$0xff]
    %v132 = vld [vmem:[#allocation2 + $0x298] sm:$0xff]
    %v133 = vld [vmem:[#allocation2 + $0x2a0] sm:$0xff]
    %v134 = vld [vmem:[#allocation2 + $0x2a8] sm:$0xff]
    %v135 = vld [vmem:[#allocation2 + $0x2b0] sm:$0xff]
    %v136 = vld [vmem:[#allocation2 + $0x2b8] sm:$0xff]
    %v137 = vld [vmem:[#allocation2 + $0x2c0] sm:$0xff]
    %v138 = vld [vmem:[#allocation2 + $0x2c8] sm:$0xff]
    %v139 = vld [vmem:[#allocation2 + $0x2d0] sm:$0xff]
    %v140 = vld [vmem:[#allocation2 + $0x2d8] sm:$0xff]
    %v141 = vld [vmem:[#allocation2 + $0x2e0] sm:$0xff]
    %v142 = vld [vmem:[#allocation2 + $0x2e8] sm:$0xff]
    %v143 = vld [vmem:[#allocation2 + $0x2f0] sm:$0xff]
    %v144 = vld [vmem:[#allocation2 + $0x2f8] sm:$0xff]
    %v145 = vld [vmem:[#allocation2 + $0x300] sm:$0xff]
    %v146 = vld [vmem:[#allocation2 + $0x308] sm:$0xff]
    %v147 = vld [vmem:[#allocation2 + $0x310] sm:$0xff]
    %v148 = vld [vmem:[#allocation2 + $0x318] sm:$0xff]
    %v149 = vld [vmem:[#allocation2 + $0x320] sm:$0xff]
    %v150 = vld [vmem:[#allocation2 + $0x328] sm:$0xff]
    %v151 = vld [vmem:[#allocation2 + $0x330] sm:$0xff]
    %v152 = vld [vmem:[#allocation2 + $0x338] sm:$0xff]
    %v153 = vld [vmem:[#allocation2 + $0x340] sm:$0xff]
    %v154 = vld [vmem:[#allocation2 + $0x348] sm:$0xff]
    %v155 = vld [vmem:[#allocation2 + $0x350] sm:$0xff]
    %v156 = vld [vmem:[#allocation2 + $0x358] sm:$0xff]
    %v157 = vld [vmem:[#allocation2 + $0x360] sm:$0xff]
    %v158 = vld [vmem:[#allocation2 + $0x368] sm:$0xff]
    %v159 = vld [vmem:[#allocation2 + $0x370] sm:$0xff]
    %v160 = vld [vmem:[#allocation2 + $0x378] sm:$0xff]
    %v161 = vld [vmem:[%s2] sm:$0x1]
    %v163 = vperm.slane %v161, 0
    %165 = vmatpush.msra.mxu0 %v64
    %166 = vmatpush.msra.mxu0 %v63
    %167 = vmatpush.msra.mxu0 %v62
    %168 = vmatpush.msra.mxu0 %v61
    %169 = vmatpush.msra.mxu0 %v60
    %170 = vmatpush.msra.mxu0 %v59
    %171 = vmatpush.msra.mxu0 %v58
    %172 = vmatpush.msra.mxu0 %v57
    %173 = vmatpush.msra.mxu0 %v56
    %174 = vmatpush.msra.mxu0 %v55
    %175 = vmatpush.msra.mxu0 %v54
    %176 = vmatpush.msra.mxu0 %v53
    %177 = vmatpush.msra.mxu0 %v52
    %178 = vmatpush.msra.mxu0 %v51
    %179 = vmatpush.msra.mxu0 %v50
    %180 = vmatpush.msra.mxu0 %v49
    %181 = vmatmul.f32.gmra.mxu0 %v42
    %v182 = vpop.f32.mrf.mxu0
    %v183 = vadd.f32 %v163, %v182
    %184 = vdwg.mxu0
    %185 = vmatpush.msra.mxu0 %v80
    %186 = vmatpush.msra.mxu0 %v79
    %187 = vmatpush.msra.mxu0 %v78
    %188 = vmatpush.msra.mxu0 %v77
    %189 = vmatpush.msra.mxu0 %v76
    %190 = vmatpush.msra.mxu0 %v75
    %191 = vmatpush.msra.mxu0 %v74
    %192 = vmatpush.msra.mxu0 %v73
    %193 = vmatpush.msra.mxu0 %v72
    %194 = vmatpush.msra.mxu0 %v71
    %195 = vmatpush.msra.mxu0 %v70
    %196 = vmatpush.msra.mxu0 %v69
    %197 = vmatpush.msra.mxu0 %v68
    %198 = vmatpush.msra.mxu0 %v67
    %199 = vmatpush.msra.mxu0 %v66
    %200 = vmatpush.msra.mxu0 %v65
    %201 = vmatmul.f32.gmra.mxu0 %v43
    %v202 = vpop.f32.mrf.mxu0
    %v203 = vadd.f32 %v183, %v202
    %204 = vdwg.mxu0
    %205 = vmatpush.msra.mxu0 %v96
    %206 = vmatpush.msra.mxu0 %v95
    %207 = vmatpush.msra.mxu0 %v94
    %208 = vmatpush.msra.mxu0 %v93
    %209 = vmatpush.msra.mxu0 %v92
    %210 = vmatpush.msra.mxu0 %v91
    %211 = vmatpush.msra.mxu0 %v90
    %212 = vmatpush.msra.mxu0 %v89
    %213 = vmatpush.msra.mxu0 %v88
    %214 = vmatpush.msra.mxu0 %v87
    %215 = vmatpush.msra.mxu0 %v86
    %216 = vmatpush.msra.mxu0 %v85
    %217 = vmatpush.msra.mxu0 %v84
    %218 = vmatpush.msra.mxu0 %v83
    %219 = vmatpush.msra.mxu0 %v82
    %220 = vmatpush.msra.mxu0 %v81
    %221 = vmatmul.f32.gmra.mxu0 %v44
    %v222 = vpop.f32.mrf.mxu0
    %v223 = vadd.f32 %v203, %v222
    %224 = vdwg.mxu0
    %225 = vmatpush.msra.mxu0 %v112
    %226 = vmatpush.msra.mxu0 %v111
    %227 = vmatpush.msra.mxu0 %v110
    %228 = vmatpush.msra.mxu0 %v109
    %229 = vmatpush.msra.mxu0 %v108
    %230 = vmatpush.msra.mxu0 %v107
    %231 = vmatpush.msra.mxu0 %v106
    %232 = vmatpush.msra.mxu0 %v105
    %233 = vmatpush.msra.mxu0 %v104
    %234 = vmatpush.msra.mxu0 %v103
    %235 = vmatpush.msra.mxu0 %v102
    %236 = vmatpush.msra.mxu0 %v101
    %237 = vmatpush.msra.mxu0 %v100
    %238 = vmatpush.msra.mxu0 %v99
    %239 = vmatpush.msra.mxu0 %v98
    %240 = vmatpush.msra.mxu0 %v97
    %241 = vmatmul.f32.gmra.mxu0 %v45
    %v242 = vpop.f32.mrf.mxu0
    %v243 = vadd.f32 %v223, %v242
    %244 = vdwg.mxu0
    %245 = vmatpush.msra.mxu0 %v128
    %246 = vmatpush.msra.mxu0 %v127
    %247 = vmatpush.msra.mxu0 %v126
    %248 = vmatpush.msra.mxu0 %v125
    %249 = vmatpush.msra.mxu0 %v124
    %250 = vmatpush.msra.mxu0 %v123
    %251 = vmatpush.msra.mxu0 %v122
    %252 = vmatpush.msra.mxu0 %v121
    %253 = vmatpush.msra.mxu0 %v120
    %254 = vmatpush.msra.mxu0 %v119
    %255 = vmatpush.msra.mxu0 %v118
    %256 = vmatpush.msra.mxu0 %v117
    %257 = vmatpush.msra.mxu0 %v116
    %258 = vmatpush.msra.mxu0 %v115
    %259 = vmatpush.msra.mxu0 %v114
    %260 = vmatpush.msra.mxu0 %v113
    %261 = vmatmul.f32.gmra.mxu0 %v46
    %v262 = vpop.f32.mrf.mxu0
    %v263 = vadd.f32 %v243, %v262
    %264 = vdwg.mxu0
    %265 = vmatpush.msra.mxu0 %v144
    %266 = vmatpush.msra.mxu0 %v143
    %267 = vmatpush.msra.mxu0 %v142
    %268 = vmatpush.msra.mxu0 %v141
    %269 = vmatpush.msra.mxu0 %v140
    %270 = vmatpush.msra.mxu0 %v139
    %271 = vmatpush.msra.mxu0 %v138
    %272 = vmatpush.msra.mxu0 %v137
    %273 = vmatpush.msra.mxu0 %v136
    %274 = vmatpush.msra.mxu0 %v135
    %275 = vmatpush.msra.mxu0 %v134
    %276 = vmatpush.msra.mxu0 %v133
    %277 = vmatpush.msra.mxu0 %v132
    %278 = vmatpush.msra.mxu0 %v131
    %279 = vmatpush.msra.mxu0 %v130
    %280 = vmatpush.msra.mxu0 %v129
    %281 = vmatmul.f32.gmra.mxu0 %v47
    %v282 = vpop.f32.mrf.mxu0
    %v283 = vadd.f32 %v263, %v282
    %284 = vdwg.mxu0
    %285 = vmatpush.msra.mxu0 %v160
    %286 = vmatpush.msra.mxu0 %v159
    %287 = vmatpush.msra.mxu0 %v158
    %288 = vmatpush.msra.mxu0 %v157
    %289 = vmatpush.msra.mxu0 %v156
    %290 = vmatpush.msra.mxu0 %v155
    %291 = vmatpush.msra.mxu0 %v154
    %292 = vmatpush.msra.mxu0 %v153
    %293 = vmatpush.msra.mxu0 %v152
    %294 = vmatpush.msra.mxu0 %v151
    %295 = vmatpush.msra.mxu0 %v150
    %296 = vmatpush.msra.mxu0 %v149
    %297 = vmatpush.msra.mxu0 %v148
    %298 = vmatpush.msra.mxu0 %v147
    %299 = vmatpush.msra.mxu0 %v146
    %300 = vmatpush.msra.mxu0 %v145
    %301 = vmatmul.f32.gmra.mxu0 %v48
    %v302 = vpop.f32.mrf.mxu0
    %v303 = vadd.f32 %v283, %v302
    %304 = vdwg.mxu0
    %v305 = vmax.f32 %v303, 0.0
    %v306 = vld [vmem:[%s3] sm:$0xff]
    %v307 = vld [vmem:[%s3 + $0x8] sm:$0xff]
    %v308 = vld [vmem:[%s3 + $0x10] sm:$0xff]
    %v309 = vld [vmem:[%s3 + $0x18] sm:$0xff]
    %v310 = vld [vmem:[%s3 + $0x20] sm:$0xff]
    %v311 = vld [vmem:[%s3 + $0x28] sm:$0xff]
    %v312 = vld [vmem:[%s3 + $0x30] sm:$0xff]
    %v313 = vld [vmem:[%s3 + $0x38] sm:$0xff]
    %v314 = vld [vmem:[%s3 + $0x40] sm:$0xff]
    %v315 = vld [vmem:[%s3 + $0x48] sm:$0xff]
    %v316 = vld [vmem:[%s3 + $0x50] sm:$0xff]
    %v317 = vld [vmem:[%s3 + $0x58] sm:$0xff]
    %v318 = vld [vmem:[%s3 + $0x60] sm:$0xff]
    %v319 = vld [vmem:[%s3 + $0x68] sm:$0xff]
    %v320 = vld [vmem:[%s3 + $0x70] sm:$0xff]
    %v321 = vld [vmem:[%s3 + $0x78] sm:$0xff]
    %v322 = vld [vmem:[%s4] sm:$0x1]
    %v324 = vperm.slane %v322, 0
    %326 = vmatpush.msra.mxu0 %v321
    %327 = vmatpush.msra.mxu0 %v320
    %328 = vmatpush.msra.mxu0 %v319
    %329 = vmatpush.msra.mxu0 %v318
    %330 = vmatpush.msra.mxu0 %v317
    %331 = vmatpush.msra.mxu0 %v316
    %332 = vmatpush.msra.mxu0 %v315
    %333 = vmatpush.msra.mxu0 %v314
    %334 = vmatpush.msra.mxu0 %v313
    %335 = vmatpush.msra.mxu0 %v312
    %336 = vmatpush.msra.mxu0 %v311
    %337 = vmatpush.msra.mxu0 %v310
    %338 = vmatpush.msra.mxu0 %v309
    %339 = vmatpush.msra.mxu0 %v308
    %340 = vmatpush.msra.mxu0 %v307
    %341 = vmatpush.msra.mxu0 %v306
    %342 = vmatmul.f32.gmra.mxu0 %v305
    %v343 = vpop.f32.mrf.mxu0
    %v344 = vadd.f32 %v324, %v343
    %345 = vdwg.mxu0
    %v346 = vmax.f32 %v344, 0.0
    %v347 = vld [vmem:[%s5] sm:$0xff]
    %v348 = vld [vmem:[%s5 + $0x8] sm:$0xff]
    %v349 = vld [vmem:[%s5 + $0x10] sm:$0xff]
    %v350 = vld [vmem:[%s5 + $0x18] sm:$0xff]
    %v351 = vld [vmem:[%s5 + $0x20] sm:$0xff]
    %v352 = vld [vmem:[%s5 + $0x28] sm:$0xff]
    %v353 = vld [vmem:[%s5 + $0x30] sm:$0xff]
    %v354 = vld [vmem:[%s5 + $0x38] sm:$0xff]
    %v355 = vld [vmem:[%s5 + $0x40] sm:$0xff]
    %v356 = vld [vmem:[%s5 + $0x48] sm:$0xff]
    %v357 = vld [vmem:[%s5 + $0x50] sm:$0xff]
    %v358 = vld [vmem:[%s5 + $0x58] sm:$0xff]
    %v359 = vld [vmem:[%s5 + $0x60] sm:$0xff]
    %v360 = vld [vmem:[%s5 + $0x68] sm:$0xff]
    %v361 = vld [vmem:[%s5 + $0x70] sm:$0xff]
    %v362 = vld [vmem:[%s5 + $0x78] sm:$0xff]
    %v363 = vld [vmem:[%s6] sm:$0x1]
    %v365 = vperm.slane %v363, 0
    %367 = vmatpush.msra.mxu0 %v362
    %368 = vmatpush.msra.mxu0 %v361
    %369 = vmatpush.msra.mxu0 %v360
    %370 = vmatpush.msra.mxu0 %v359
    %371 = vmatpush.msra.mxu0 %v358
    %372 = vmatpush.msra.mxu0 %v357
    %373 = vmatpush.msra.mxu0 %v356
    %374 = vmatpush.msra.mxu0 %v355
    %375 = vmatpush.msra.mxu0 %v354
    %376 = vmatpush.msra.mxu0 %v353
    %377 = vmatpush.msra.mxu0 %v352
    %378 = vmatpush.msra.mxu0 %v351
    %379 = vmatpush.msra.mxu0 %v350
    %380 = vmatpush.msra.mxu0 %v349
    %381 = vmatpush.msra.mxu0 %v348
    %382 = vmatpush.msra.mxu0 %v347
    %383 = vmatmul.f32.gmra.mxu0 %v346
    %v384 = vpop.f32.mrf.mxu0
    %v385 = vadd.f32 %v365, %v384
    %386 = vdwg.mxu0
    %387 = vst [vmem:[%s7] sm:$0xff] %v385
    // Predicated region
    $region34: #{simplenet_forward.1} parent=1 // pred_check
      _
    $region35: #{simplenet_forward.1} parent=1 // pred_check_branch
      %389 = sbr.rel (0) target = $region37
    $region36: #{simplenet_forward.1} parent=1 // pred_region
      _
    $region37: #{simplenet_forward.1} parent=1 // pred_fallthru
      _
    // Predicated region
    $region38: #{simplenet_forward.1} parent=1 // pred_check
      _
    $region39: #{simplenet_forward.1} parent=1 // pred_check_branch
      %391 = sbr.rel (0) target = $region41
    $region40: #{simplenet_forward.1} parent=1 // pred_region
      _
    $region41: #{simplenet_forward.1} parent=1 // pred_fallthru
      _
    %392 = vsyncpa [#allocation3], 1

</llo_original>
